<compile_context>
chip_gen: v5e
topology: v5e:2x2
jax: 0.10.0
libtpu: 0.0.40
codegen_flags: <defaults>
</compile_context>

<pallas_src>
import functools

import jax
import jax.numpy as jnp
from jax.experimental import pallas as pl
from jax.experimental.pallas import tpu as pltpu

_MIB = 1024 * 1024


def _round_up(x, m):
    return -(-x // m) * m


def _vmem_capacity_bytes():
    try:
        cap = int(pltpu.get_tpu_info().vmem_capacity_bytes)
    except Exception:
        cap = 64 * _MIB                       # conservative (v7x) default
    return max(32 * _MIB, min(cap, 256 * _MIB))


def _gate_dtype(x_dtype):
    """bf16 gate epilogue only where the VPU has bf16 ALUs (v6e/v7x)."""
    if jnp.dtype(x_dtype) != jnp.dtype(jnp.bfloat16):
        return jnp.float32
    try:
        kind = jax.devices()[0].device_kind.lower()
    except Exception:
        kind = ""
    if "v5" in kind:                          # v5e/v5p: no bf16 VALU -> keep f32
        return jnp.float32
    return jnp.bfloat16


# ----------------------------------------------------------------------------
# Fused single-pass kernel: pool -> MLP -> sigmoid -> apply, one batch / step.
# ----------------------------------------------------------------------------
def _fused_kernel(x_ref, w1_ref, w2_ref, wc_ref, bc_ref, o_ref, *, inv_hw, gate_dtype):
    """x_ref: (1, C, HW)  w1_ref: (Cr, C)  w2_ref: (C, Cr)
       wc_ref: (1, C)     bc_ref: (1, 1) SMEM    o_ref: (1, C, HW)"""
    x = x_ref[0]                                                      # (C, HW)
    # Channel SE: global average pool (f32 accumulate) + 2-layer MLP + sigmoid.
    pooled = jnp.sum(x, axis=-1, keepdims=True, dtype=jnp.float32) * inv_hw   # (C, 1)
    h = jnp.maximum(
        jnp.dot(w1_ref[...].astype(jnp.float32), pooled,
                preferred_element_type=jnp.float32), 0.0)             # (Cr, 1)
    yc = jax.nn.sigmoid(
        jnp.dot(w2_ref[...].astype(jnp.float32), h,
                preferred_element_type=jnp.float32))                  # (C, 1)
    # Spatial SE: lane-dense (1, C) @ (C, HW) 1x1 conv + sigmoid.
    s = jnp.dot(wc_ref[...].astype(x.dtype), x,
                preferred_element_type=jnp.float32)                   # (1, HW)
    s = jax.nn.sigmoid(s + bc_ref[0, 0])
    # Fused apply: out = x * (yc + s)  ==  cSE(x) + sSE(x).
    scale = yc.astype(gate_dtype) + s.astype(gate_dtype)              # (C, HW)
    o_ref[0] = (x * scale).astype(o_ref.dtype)


# ----------------------------------------------------------------------------
# 2-pass path, pass 1: per-tile partial pooled sums (fully parallel grid).
# ----------------------------------------------------------------------------
def _pool_kernel(x_ref, psum_ref):
    """x_ref: (1, C, t1)   psum_ref: (1, 1, C, 1)  f32 partial sum."""
    psum_ref[0, 0] = jnp.sum(x_ref[0], axis=-1, keepdims=True, dtype=jnp.float32)


# ----------------------------------------------------------------------------
# 2-pass path, pass 2: streaming apply  out = x * (yc + sigmoid(wc @ x + b)).
# ----------------------------------------------------------------------------
def _apply_kernel(x_ref, yc_ref, wc_ref, bc_ref, o_ref, *, gate_dtype):
    """x_ref : (1, C, t2)  yc_ref: (1, C, 1) f32  wc_ref: (1, C)
       bc_ref: (1, 1) SMEM  o_ref : (1, C, t2)  (lane-dense: t2 % 128 == 0)."""
    x = x_ref[0]                                                      # (C, t2)
    s = jnp.dot(wc_ref[...].astype(x.dtype), x,
                preferred_element_type=jnp.float32)                   # (1, t2)
    s = jax.nn.sigmoid(s + bc_ref[0, 0])
    scale = yc_ref[0].astype(gate_dtype) + s.astype(gate_dtype)       # (C, t2)
    o_ref[0] = (x * scale).astype(o_ref.dtype)


# ----------------------------------------------------------------------------
# Dispatch / tiling decisions (generation-aware).
# ----------------------------------------------------------------------------
def _fused_fits(hw, c, itemsize, vmem_cap):
    # 2x in + 2x out (double-buffered blocks, native dtype) + ~2 f32-sized temps.
    return c * hw * (4 * itemsize + 8) <= int(vmem_cap * 0.62)


def _plan_two_pass_tiles(hw, c, itemsize, vmem_cap):
    """Pick pass-2 tile t2 (multiple of 128), padded HW, and a larger pass-1 tile."""
    # Pass 2 streams x in + out (double-buffered) + f32 gate temps.
    budget2 = min(24 * _MIB, (vmem_cap * 3) // 8)
    per_lane2 = c * (4 * itemsize + 8)
    max_t2 = max(128, (budget2 // per_lane2) // 128 * 128)

    hw128 = _round_up(hw, 128)
    t2 = hwp = None
    if hw % 128 == 0:
        # Prefer an exact (no-padding) 128-multiple divisor of HW if it is decent.
        t = min(max_t2, hw)
        while t >= 128:
            if hw % t == 0:
                break
            t -= 128
        if t >= min(512, max_t2, hw):
            t2, hwp = t, hw
    if t2 is None:
        if hw128 <= max_t2:
            t2, hwp = hw128, hw128
        else:
            n = -(-hw128 // max_t2)
            t2 = _round_up(-(-hw // n), 128)       # rebalance -> padding < 128 * n
            hwp = t2 * n
    n_t2 = hwp // t2

    # Pass 1 only streams one (read-only) tensor: allow a bigger tile.
    budget1 = min(48 * _MIB, (vmem_cap * 3) // 8)
    per_lane1 = c * (2 * itemsize + 4)
    max_t1 = max(t2, (budget1 // per_lane1) // 128 * 128)
    k = 1
    for cand in range(min(n_t2, max_t1 // t2), 0, -1):
        if n_t2 % cand == 0:
            k = cand
            break
    t1 = t2 * k
    n_t1 = n_t2 // k
    return t1, n_t1, t2, n_t2, hwp


# ----------------------------------------------------------------------------
# Wrapper
# ----------------------------------------------------------------------------
def scse_forward(x_nchw, w_fc1, w_fc2, w_conv, b_conv, *, force_two_pass=False):
    """x_nchw: (B, C, H, W); torch-convention parameters:
       w_fc1: (Cr, C), w_fc2: (C, Cr), w_conv: (1, C, 1, 1), b_conv: (1,)."""
    B, C, H, W = x_nchw.shape
    HW = H * W
    Cr = w_fc1.shape[0]
    dtype = x_nchw.dtype
    itemsize = jnp.dtype(dtype).itemsize

    x = x_nchw.reshape(B, C, HW)                  # free, contiguous reshape
    wc = w_conv.reshape(1, C)
    bc = b_conv.reshape(1, 1).astype(jnp.float32)

    vmem_cap = _vmem_capacity_bytes()
    vlimit = int(min(vmem_cap * 0.8, 110 * _MIB))
    gdt = _gate_dtype(dtype)

    # ------------------------- Fused single pass ----------------------------
    if _fused_fits(HW, C, itemsize, vmem_cap) and not force_two_pass:
        # TODO(synk): with B == 1 on v7x one TensorCore idles here; a 2-TC
        # spatial split of the fused body would recover up to ~2x in that case.
        out = pl.pallas_call(
            functools.partial(_fused_kernel, inv_hw=1.0 / HW, gate_dtype=gdt),
            out_shape=jax.ShapeDtypeStruct((B, C, HW), dtype),
            grid_spec=pltpu.PrefetchScalarGridSpec(
                num_scalar_prefetch=0,
                grid=(B,),
                in_specs=[
                    pl.BlockSpec((1, C, HW), lambda b: (b, 0, 0)),
                    pl.BlockSpec((Cr, C), lambda b: (0, 0)),
                    pl.BlockSpec((C, Cr), lambda b: (0, 0)),
                    pl.BlockSpec((1, C), lambda b: (0, 0)),
                    pl.BlockSpec(memory_space=pltpu.MemorySpace.SMEM),
                ],
                out_specs=pl.BlockSpec((1, C, HW), lambda b: (b, 0, 0)),
            ),
            compiler_params=pltpu.CompilerParams(
                dimension_semantics=("parallel",),
                vmem_limit_bytes=vlimit,
            ),
            cost_estimate=pl.CostEstimate(
                flops=int(6 * B * C * HW),
                transcendentals=int(B * (HW + C)),
                bytes_accessed=int(2 * B * C * HW * itemsize)),
        )(x, w_fc1, w_fc2, wc, bc)
        return out.reshape(B, C, H, W)

    # --------------------- 2-pass streaming (large maps) --------------------
    t1, n_t1, t2, n_t2, HWp = _plan_two_pass_tiles(HW, C, itemsize, vmem_cap)
    x_p = x if HWp == HW else jnp.pad(x, ((0, 0), (0, 0), (0, HWp - HW)))

    # Pass 1: per-tile partial pooled sums.  Fully parallel grid (megacore can
    # shard the HW-tile axis on v7x even when B == 1).  Zero padding adds 0.
    psums = pl.pallas_call(
        _pool_kernel,
        out_shape=jax.ShapeDtypeStruct((B, n_t1, C, 1), jnp.float32),
        grid_spec=pltpu.PrefetchScalarGridSpec(
            num_scalar_prefetch=0,
            grid=(B, n_t1),
            in_specs=[pl.BlockSpec((1, C, t1), lambda b, t: (b, 0, t))],
            out_specs=pl.BlockSpec((1, 1, C, 1), lambda b, t: (b, t, 0, 0)),
        ),
        compiler_params=pltpu.CompilerParams(
            dimension_semantics=("parallel", "parallel"),
            vmem_limit_bytes=vlimit,
        ),
        cost_estimate=pl.CostEstimate(
            flops=int(B * C * HWp),
            transcendentals=0,
            bytes_accessed=int(B * C * HWp * itemsize)),
    )(x_p)

    # Tiny channel MLP + sigmoid in plain JAX (negligible FLOPs; avoids
    # degenerate N=1 MXU matmuls and simplifies the kernels).
    pooled = jnp.sum(psums[..., 0], axis=1) * (1.0 / HW)              # (B, C) f32
    h = jnp.maximum(pooled @ w_fc1.T.astype(jnp.float32), 0.0)        # (B, Cr)
    yc = jax.nn.sigmoid(h @ w_fc2.T.astype(jnp.float32))              # (B, C)
    yc = yc[:, :, None]                                               # (B, C, 1)

    # Pass 2: streaming apply  out = x * (yc + sigmoid(wc @ x + b)).
    out = pl.pallas_call(
        functools.partial(_apply_kernel, gate_dtype=gdt),
        out_shape=jax.ShapeDtypeStruct((B, C, HWp), dtype),
        grid_spec=pltpu.PrefetchScalarGridSpec(
            num_scalar_prefetch=0,
            grid=(B, n_t2),
            in_specs=[
                pl.BlockSpec((1, C, t2), lambda b, t: (b, 0, t)),
                pl.BlockSpec((1, C, 1), lambda b, t: (b, 0, 0)),
                pl.BlockSpec((1, C), lambda b, t: (0, 0)),
                pl.BlockSpec(memory_space=pltpu.MemorySpace.SMEM),
            ],
            out_specs=pl.BlockSpec((1, C, t2), lambda b, t: (b, 0, t)),
        ),
        compiler_params=pltpu.CompilerParams(
            dimension_semantics=("parallel", "parallel"),
            vmem_limit_bytes=vlimit,
        ),
        cost_estimate=pl.CostEstimate(
            flops=int(4 * B * C * HWp),
            transcendentals=int(B * HWp),
            bytes_accessed=int(2 * B * C * HWp * itemsize)),
    )(x_p, yc, wc, bc)

    if HWp != HW:
        out = out[:, :, :HW]
    return out.reshape(B, C, H, W)


# ----------------------------------------------------------------------------
# Pure-JAX reference mirroring the PyTorch forward exactly.
# ----------------------------------------------------------------------------
def scse_reference(x_nchw, w_fc1, w_fc2, w_conv, b_conv):
    B, C, H, W = x_nchw.shape
    pooled = jnp.mean(x_nchw, axis=(2, 3))                            # (B, C)
    h = jnp.maximum(pooled @ w_fc1.T, 0.0)                            # (B, Cr)
    yc = jax.nn.sigmoid(h @ w_fc2.T)                                  # (B, C)
    cse = x_nchw * yc[:, :, None, None]
    s = jnp.einsum("bchw,c->bhw", x_nchw, w_conv.reshape(C)) + b_conv[0]
    sse = x_nchw * jax.nn.sigmoid(s)[:, None, :, :]
    return cse + sse


if __name__ == "__main__":
    B, C, reduction = 2, 32, 16
    Cr = C // reduction

    key = jax.random.PRNGKey(0)
    k_x1, k_x2, k_w1, k_w2, k_wc, k_bc = jax.random.split(key, 6)

    w_fc1 = jax.random.normal(k_w1, (Cr, C), dtype=jnp.float32) * 0.1    # Linear(C -> Cr)
    w_fc2 = jax.random.normal(k_w2, (C, Cr), dtype=jnp.float32) * 0.1    # Linear(Cr -> C)
    w_conv = jax.random.normal(k_wc, (1, C, 1, 1), dtype=jnp.float32) * 0.1
    b_conv = jax.random.normal(k_bc, (1,), dtype=jnp.float32) * 0.1

    # Case 1: HW multiple of 128 -> fused single-pass path.
    x1 = jax.random.normal(k_x1, (B, C, 16, 16), dtype=jnp.float32)
    out1 = jax.block_until_ready(scse_forward(x1, w_fc1, w_fc2, w_conv, b_conv))
    ref1 = scse_reference(x1, w_fc1, w_fc2, w_conv, b_conv)
    assert out1.shape == x1.shape
    assert jnp.allclose(out1, ref1, atol=1e-5, rtol=1e-5), "fused path mismatch"

    # Case 2: ragged HW (15x15) -> exercises fused path with ragged lanes AND
    # the forced 2-pass path (128-padding + parallel pooled sums + apply).
    x2 = jax.random.normal(k_x2, (B, C, 15, 15), dtype=jnp.float32)
    ref2 = scse_reference(x2, w_fc1, w_fc2, w_conv, b_conv)

    out2a = jax.block_until_ready(scse_forward(x2, w_fc1, w_fc2, w_conv, b_conv))
    assert out2a.shape == x2.shape
    assert jnp.allclose(out2a, ref2, atol=1e-5, rtol=1e-5), "fused ragged-HW mismatch"

    out2b = jax.block_until_ready(
        scse_forward(x2, w_fc1, w_fc2, w_conv, b_conv, force_two_pass=True))
    assert out2b.shape == x2.shape
    assert jnp.allclose(out2b, ref2, atol=1e-5, rtol=1e-5), "two-pass path mismatch"

    print("KERNEL_OK")
</pallas_src>

<mosaic_0001>
module attributes {stable_mosaic.version = 11 : i64} {
  func.func @_fused_kernel(%arg0: i32, %arg1: memref<1x32x256xf32, #tpu.memory_space<vmem>>, %arg2: memref<2x32xf32, #tpu.memory_space<vmem>>, %arg3: memref<32x2xf32, #tpu.memory_space<vmem>>, %arg4: memref<1x32xf32, #tpu.memory_space<vmem>>, %arg5: memref<1x1xf32, #tpu.memory_space<smem>>, %arg6: memref<1x32x256xf32, #tpu.memory_space<vmem>>) attributes {dimension_semantics = [#tpu.dimension_semantics<parallel>], iteration_bounds = array<i64: 2>, scalar_prefetch = 0 : i64, scratch_operands = 0 : i64, tpu.core_type = #tpu.core_type<tc>, window_params = [{transform_indices = @transform_0, window_bounds = array<i64: 1, 32, 256>}, {pipeline_mode = #tpu.pipeline_mode<synchronous>, transform_indices = @transform_1, window_bounds = array<i64: 2, 32>}, {pipeline_mode = #tpu.pipeline_mode<synchronous>, transform_indices = @transform_2, window_bounds = array<i64: 32, 2>}, {pipeline_mode = #tpu.pipeline_mode<synchronous>, transform_indices = @transform_3, window_bounds = array<i64: 1, 32>}, {transform_indices = @transform_4, window_bounds = array<i64: 1, 1>}, {transform_indices = @transform_5, window_bounds = array<i64: 1, 32, 256>}]} {
    %c0 = arith.constant 0 : index
    %c0_0 = arith.constant 0 : index
    %c0_1 = arith.constant 0 : index
    %0 = vector.load %arg1[%c0, %c0_0, %c0_1] : memref<1x32x256xf32, #tpu.memory_space<vmem>>, vector<1x32x256xf32>
    %1 = vector.shape_cast %0 : vector<1x32x256xf32> to vector<32x256xf32>
    %cst = arith.constant dense<0.000000e+00> : vector<32xf32>
    %2 = vector.multi_reduction <add>, %1, %cst [1] : vector<32x256xf32> to vector<32xf32>
    %3 = vector.shape_cast %2 : vector<32xf32> to vector<32x1xf32>
    %cst_2 = arith.constant 3.906250e-03 : f32
    %4 = vector.broadcast %cst_2 : f32 to vector<32x1xf32>
    %5 = arith.mulf %3, %4 : vector<32x1xf32>
    %c0_3 = arith.constant 0 : index
    %c0_4 = arith.constant 0 : index
    %6 = vector.load %arg2[%c0_3, %c0_4] : memref<2x32xf32, #tpu.memory_space<vmem>>, vector<2x32xf32>
    %cst_5 = arith.constant dense<0.000000e+00> : vector<2x1xf32>
    %7 = tpu.matmul %6, %5, %cst_5 {dimension_numbers = #tpu.dot_dimension_numbers<[1], [0], [0], [1], [0, 0, 1, 1], [], []>} : vector<2x32xf32>, vector<32x1xf32>, vector<2x1xf32> -> vector<2x1xf32>
    %cst_6 = arith.constant 0.000000e+00 : f32
    %8 = vector.broadcast %cst_6 : f32 to vector<2x1xf32>
    %9 = arith.maximumf %7, %8 : vector<2x1xf32>
    %c0_7 = arith.constant 0 : index
    %c0_8 = arith.constant 0 : index
    %10 = vector.load %arg3[%c0_7, %c0_8] : memref<32x2xf32, #tpu.memory_space<vmem>>, vector<32x2xf32>
    %cst_9 = arith.constant dense<0.000000e+00> : vector<32x1xf32>
    %11 = tpu.matmul %10, %9, %cst_9 {dimension_numbers = #tpu.dot_dimension_numbers<[1], [0], [0], [1], [0, 0, 1, 1], [], []>} : vector<32x2xf32>, vector<2x1xf32>, vector<32x1xf32> -> vector<32x1xf32>
    %12 = arith.negf %11 : vector<32x1xf32>
    %13 = math.exp %12 : vector<32x1xf32>
    %cst_10 = arith.constant 1.000000e+00 : f32
    %14 = vector.broadcast %cst_10 : f32 to vector<32x1xf32>
    %15 = arith.addf %14, %13 : vector<32x1xf32>
    %16 = arith.divf %14, %15 : vector<32x1xf32>
    %c0_11 = arith.constant 0 : index
    %c0_12 = arith.constant 0 : index
    %17 = vector.load %arg4[%c0_11, %c0_12] : memref<1x32xf32, #tpu.memory_space<vmem>>, vector<1x32xf32>
    %cst_13 = arith.constant dense<0.000000e+00> : vector<1x256xf32>
    %18 = tpu.matmul %17, %1, %cst_13 {dimension_numbers = #tpu.dot_dimension_numbers<[1], [0], [0], [1], [0, 0, 1, 1], [], []>} : vector<1x32xf32>, vector<32x256xf32>, vector<1x256xf32> -> vector<1x256xf32>
    %c0_14 = arith.constant 0 : index
    %c0_15 = arith.constant 0 : index
    %19 = memref.load %arg5[%c0_14, %c0_15] : memref<1x1xf32, #tpu.memory_space<smem>>
    %20 = vector.broadcast %19 : f32 to vector<1x256xf32>
    %21 = arith.addf %18, %20 : vector<1x256xf32>
    %22 = arith.negf %21 : vector<1x256xf32>
    %23 = math.exp %22 : vector<1x256xf32>
    %cst_16 = arith.constant 1.000000e+00 : f32
    %24 = vector.broadcast %cst_16 : f32 to vector<1x256xf32>
    %25 = arith.addf %24, %23 : vector<1x256xf32>
    %26 = arith.divf %24, %25 : vector<1x256xf32>
    %27 = vector.broadcast %16 : vector<32x1xf32> to vector<32x256xf32>
    %28 = vector.broadcast %26 : vector<1x256xf32> to vector<32x256xf32>
    %29 = arith.addf %27, %28 : vector<32x256xf32>
    %30 = arith.mulf %1, %29 : vector<32x256xf32>
    %c0_17 = arith.constant 0 : index
    %c0_18 = arith.constant 0 : index
    %c0_19 = arith.constant 0 : index
    %31 = vector.load %arg6[%c0_17, %c0_18, %c0_19] : memref<1x32x256xf32, #tpu.memory_space<vmem>>, vector<1x32x256xf32>
    %32 = vector.shape_cast %31 : vector<1x32x256xf32> to vector<32x256xf32>
    %33 = vector.shape_cast %30 : vector<32x256xf32> to vector<1x32x256xf32>
    tpu.vector_store %arg6[%c0_17, %c0_18, %c0_19], %33 {strides = array<i32>} : memref<1x32x256xf32, #tpu.memory_space<vmem>>, vector<1x32x256xf32>,
    return
  }
  func.func @transform_0(%arg0: i32) -> (i32, i32, i32) {
    %c0_i32 = arith.constant 0 : i32
    %c0_i32_0 = arith.constant 0 : i32
    %c0_i32_1 = arith.constant 0 : i32
    return %arg0, %c0_i32, %c0_i32_0 : i32, i32, i32
  }
  func.func @transform_1(%arg0: i32) -> (i32, i32) {
    %c0_i32 = arith.constant 0 : i32
    %c0_i32_0 = arith.constant 0 : i32
    %c0_i32_1 = arith.constant 0 : i32
    return %c0_i32, %c0_i32_0 : i32, i32
  }
  func.func @transform_2(%arg0: i32) -> (i32, i32) {
    %c0_i32 = arith.constant 0 : i32
    %c0_i32_0 = arith.constant 0 : i32
    %c0_i32_1 = arith.constant 0 : i32
    return %c0_i32, %c0_i32_0 : i32, i32
  }
  func.func @transform_3(%arg0: i32) -> (i32, i32) {
    %c0_i32 = arith.constant 0 : i32
    %c0_i32_0 = arith.constant 0 : i32
    %c0_i32_1 = arith.constant 0 : i32
    return %c0_i32, %c0_i32_0 : i32, i32
  }
  func.func @transform_4(%arg0: i32) -> (i32, i32) {
    %c0_i32 = arith.constant 0 : i32
    %c0_i32_0 = arith.constant 0 : i32
    %c0_i32_1 = arith.constant 0 : i32
    return %c0_i32, %c0_i32_0 : i32, i32
  }
  func.func @transform_5(%arg0: i32) -> (i32, i32, i32) {
    %c0_i32 = arith.constant 0 : i32
    %c0_i32_0 = arith.constant 0 : i32
    %c0_i32_1 = arith.constant 0 : i32
    return %arg0, %c0_i32, %c0_i32_0 : i32, i32, i32
  }
}

</mosaic_0001>

<llo_original>
// kernel: tpu_custom_call.1
$region0: #{tpu_custom_call.1}
  #allocation0 [shape = 'u32[]', space=smem, size = 0x4, offset = 0x4, fixed_abs, tag = 'smem constant byte address 0x4 - core index']
  #allocation1 [shape = 'u32[72,128]{1,0:T(1,128)}', space=vmem, size = 0x9000, scoped, tag = 'internal scratch']
  #allocation2 [shape = 'f32[1,1]{1,0:T(1,128)S(6)}', space=smem, size = 0x200, scoped, tag = 'scoped memory for tpu_custom_call.1']
  %s0 = inlined_call_operand.hbm [shape: f32[2,32,256], index: 0, kind: input, shape index: {}]
  %s1 = inlined_call_operand.vmem [shape: f32[2,32], index: 1, kind: input, shape index: {}]
  %s2 = inlined_call_operand.vmem [shape: f32[32,2], index: 2, kind: input, shape index: {}]
  %s3 = inlined_call_operand.vmem [shape: f32[1,32], index: 3, kind: input, shape index: {}]
  %s4 = inlined_call_operand.<no memory space> [shape: f32[1,1], index: 4, kind: input, shape index: {}]
  %s5 = inlined_call_operand.hbm [shape: f32[2,32,256], index: 5, kind: output, shape index: {}]
  %s6 = sld [smem:[#allocation0]]
  $region57: #{tpu_custom_call.1} parent=0
    _
  %s8 = ssub.s32 1, %s6
  %s9 = scalar_select 0, %s8, %s6
  %10 = sst [smem:[#allocation2]] %s4
  $region1: #{tpu_custom_call.1} parent=0
    #allocation3 [shape = 'u8[65536]{0}', space=vmem, size = 0x10000, scoped, tag = 'input window, operand 0']
    #allocation4 [shape = 's32[2]{0}', space=sflag, size = 0x8, scoped, tag = 'scoped memory for tpu_custom_call.1']
    #allocation5 [shape = 's32[2]{0}', space=sflag, size = 0x8, scoped, tag = 'scoped memory for tpu_custom_call.1']
    #allocation6 [shape = 'u8[65536]{0}', space=vmem, size = 0x10000, scoped, tag = 'output window, operand 0']
    %11 = vsyncpa [#allocation4], 0
    %s12 = scalar_lea.sflag [#allocation4], 1
    %13 = vsyncpa %s12, 0
    %14 = vsyncpa [#allocation5], 0
    %s15 = scalar_lea.sflag [#allocation5], 1
    %16 = vsyncpa %s15, 0
    loop: start=0, step=1, limit=4
    $region2: #{tpu_custom_call.1} parent=1 // loop_pre_header
      _
    $region3: #{tpu_custom_call.1} parent=1 // loop_header
      %s18 = sphi 0, %s22
      %p19 = scmp.ge.s32.totalorder %s18, 4
      %s28 = sphi 0, %s30
      %s31 = sphi 0, %s28
      %s32 = sphi 0, %s31
      %s48 = sphi 0, %s32
      %s52 = sphi 0, %s52
      %s54 = sphi 0, %s52
      %s55 = sphi 0, %s54
      %s69 = sphi 0, %s55
      %s73 = sphi 0, %s73
      %s75 = sphi 0, %s73
      %s76 = sphi 0, %s75
      %s90 = sphi 0, %s76
      %s94 = sphi 0, %s94
      %s96 = sphi 0, %s94
      %s97 = sphi 0, %s96
      %s111 = sphi 0, %s97
      %s115 = sphi 0, %s115
      %s117 = sphi 0, %s115
      %s118 = sphi 0, %s117
      %s132 = sphi 0, %s118
      %s138 = sphi 0, %s140
      %s141 = sphi 0, %s138
      %s142 = sphi 0, %s141
      %s158 = sphi 0, %s142
    $region4: #{tpu_custom_call.1} parent=1 // loop_header_branch
      %21 = sbr.rel (%p19) target = $region8
    $region5: #{tpu_custom_call.1} parent=1 // loop_body
      %s23 = ssub.s32 %s18, 1
      %s24 = ssub.s32 %s18, 2
      %s25 = sadd.s32 %s18, 1
      %s26 = ssub.s32 %s18, %s25
      %p27 = scmp.eq.s32.totalorder %s26, 0
      %s29 = sadd.s32 %s28, 1
      %s30 = scalar_select %p27, %s28, %s29
      %p33 = pneg %p27
      %p34 = scmp.eq.s32.totalorder %s18, 1
      %p35 = por %p33, %p34
      %p36 = scmp.ne.s32.totalorder %s28, %s31
      %p37 = scmp.eq.s32.totalorder %s18, 0
      %p38 = por %p36, %p37
      %p39 = scmp.ne.s32.totalorder %s28, %s31
      %p40 = scmp.eq.s32.totalorder %s23, 1
      %p41 = por %p39, %p40
      %p42 = scmp.ne.s32.totalorder %s31, %s32
      %p43 = scmp.eq.s32.totalorder %s23, 0
      %p44 = por %p42, %p43
      %p45 = scmp.ne.s32.totalorder %s31, %s32
      %p46 = scmp.eq.s32.totalorder %s24, 1
      %p47 = por %p45, %p46
      %p49 = scmp.ne.s32.totalorder %s32, %s48
      %p50 = scmp.eq.s32.totalorder %s24, 0
      %p51 = por %p49, %p50
      %s53 = sadd.s32 %s52, 1
      %p56 = scmp.eq.s32.totalorder %s18, 1
      %p57 = scmp.ne.s32.totalorder %s52, %s54
      %p58 = scmp.eq.s32.totalorder %s18, 0
      %p59 = por %p57, %p58
      %p60 = scmp.ne.s32.totalorder %s52, %s54
      %p61 = scmp.eq.s32.totalorder %s23, 1
      %p62 = por %p60, %p61
      %p63 = scmp.ne.s32.totalorder %s54, %s55
      %p64 = scmp.eq.s32.totalorder %s23, 0
      %p65 = por %p63, %p64
      %p66 = scmp.ne.s32.totalorder %s54, %s55
      %p67 = scmp.eq.s32.totalorder %s24, 1
      %p68 = por %p66, %p67
      %p70 = scmp.ne.s32.totalorder %s55, %s69
      %p71 = scmp.eq.s32.totalorder %s24, 0
      %p72 = por %p70, %p71
      %s74 = sadd.s32 %s73, 1
      %p77 = scmp.eq.s32.totalorder %s18, 1
      %p78 = scmp.ne.s32.totalorder %s73, %s75
      %p79 = scmp.eq.s32.totalorder %s18, 0
      %p80 = por %p78, %p79
      %p81 = scmp.ne.s32.totalorder %s73, %s75
      %p82 = scmp.eq.s32.totalorder %s23, 1
      %p83 = por %p81, %p82
      %p84 = scmp.ne.s32.totalorder %s75, %s76
      %p85 = scmp.eq.s32.totalorder %s23, 0
      %p86 = por %p84, %p85
      %p87 = scmp.ne.s32.totalorder %s75, %s76
      %p88 = scmp.eq.s32.totalorder %s24, 1
      %p89 = por %p87, %p88
      %p91 = scmp.ne.s32.totalorder %s76, %s90
      %p92 = scmp.eq.s32.totalorder %s24, 0
      %p93 = por %p91, %p92
      %s95 = sadd.s32 %s94, 1
      %p98 = scmp.eq.s32.totalorder %s18, 1
      %p99 = scmp.ne.s32.totalorder %s94, %s96
      %p100 = scmp.eq.s32.totalorder %s18, 0
      %p101 = por %p99, %p100
      %p102 = scmp.ne.s32.totalorder %s94, %s96
      %p103 = scmp.eq.s32.totalorder %s23, 1
      %p104 = por %p102, %p103
      %p105 = scmp.ne.s32.totalorder %s96, %s97
      %p106 = scmp.eq.s32.totalorder %s23, 0
      %p107 = por %p105, %p106
      %p108 = scmp.ne.s32.totalorder %s96, %s97
      %p109 = scmp.eq.s32.totalorder %s24, 1
      %p110 = por %p108, %p109
      %p112 = scmp.ne.s32.totalorder %s97, %s111
      %p113 = scmp.eq.s32.totalorder %s24, 0
      %p114 = por %p112, %p113
      %s116 = sadd.s32 %s115, 1
      %p119 = scmp.eq.s32.totalorder %s18, 1
      %p120 = scmp.ne.s32.totalorder %s115, %s117
      %p121 = scmp.eq.s32.totalorder %s18, 0
      %p122 = por %p120, %p121
      %p123 = scmp.ne.s32.totalorder %s115, %s117
      %p124 = scmp.eq.s32.totalorder %s23, 1
      %p125 = por %p123, %p124
      %p126 = scmp.ne.s32.totalorder %s117, %s118
      %p127 = scmp.eq.s32.totalorder %s23, 0
      %p128 = por %p126, %p127
      %p129 = scmp.ne.s32.totalorder %s117, %s118
      %p130 = scmp.eq.s32.totalorder %s24, 1
      %p131 = por %p129, %p130
      %p133 = scmp.ne.s32.totalorder %s118, %s132
      %p134 = scmp.eq.s32.totalorder %s24, 0
      %p135 = por %p133, %p134
      %s136 = ssub.s32 %s18, %s25
      %p137 = scmp.eq.s32.totalorder %s136, 0
      %s139 = sadd.s32 %s138, 1
      %s140 = scalar_select %p137, %s138, %s139
      %p143 = pneg %p137
      %p144 = scmp.eq.s32.totalorder %s18, 1
      %p145 = por %p143, %p144
      %p146 = scmp.ne.s32.totalorder %s138, %s141
      %p147 = scmp.eq.s32.totalorder %s18, 0
      %p148 = por %p146, %p147
      %p149 = scmp.ne.s32.totalorder %s138, %s141
      %p150 = scmp.eq.s32.totalorder %s23, 1
      %p151 = por %p149, %p150
      %p152 = scmp.ne.s32.totalorder %s141, %s142
      %p153 = scmp.eq.s32.totalorder %s23, 0
      %p154 = por %p152, %p153
      %p155 = scmp.ne.s32.totalorder %s141, %s142
      %p156 = scmp.eq.s32.totalorder %s24, 1
      %p157 = por %p155, %p156
      %p159 = scmp.ne.s32.totalorder %s142, %s158
      %p160 = scmp.eq.s32.totalorder %s24, 0
      %p161 = por %p159, %p160
      %p162 = scmp.le.s32.totalorder 1, %s18
      %p163 = scmp.lt.s32.totalorder %s18, 3
      %p164 = pnand %p162, %p163
      %p165 = pneg %p164
      // Predicated region
      $region9: #{tpu_custom_call.1} parent=5 // pred_check
        _
      $region10: #{tpu_custom_call.1} parent=5 // pred_check_branch
        %167 = sbr.rel (%p164) target = $region12
      $region11: #{tpu_custom_call.1} parent=5 // pred_region
        %s168 = ssub.s32 %s18, 1
        // Predicated region
        $region13: #{tpu_custom_call.1} parent=11 // pred_check
          %p169 = pneg %p65
        $region14: #{tpu_custom_call.1} parent=11 // pred_check_branch
          %171 = sbr.rel (%p169) target = $region16
        $region15: #{tpu_custom_call.1} parent=11 // pred_region
          _
        $region16: #{tpu_custom_call.1} parent=11 // pred_fallthru
          _
        // Predicated region
        $region17: #{tpu_custom_call.1} parent=11 // pred_check
          %p172 = pneg %p86
        $region18: #{tpu_custom_call.1} parent=11 // pred_check_branch
          %174 = sbr.rel (%p172) target = $region20
        $region19: #{tpu_custom_call.1} parent=11 // pred_region
          _
        $region20: #{tpu_custom_call.1} parent=11 // pred_fallthru
          _
        // Predicated region
        $region21: #{tpu_custom_call.1} parent=11 // pred_check
          %p175 = pneg %p107
        $region22: #{tpu_custom_call.1} parent=11 // pred_check_branch
          %177 = sbr.rel (%p175) target = $region24
        $region23: #{tpu_custom_call.1} parent=11 // pred_region
          _
        $region24: #{tpu_custom_call.1} parent=11 // pred_fallthru
          _
        // Predicated region
        $region25: #{tpu_custom_call.1} parent=11 // pred_check
          %p178 = pneg %p128
        $region26: #{tpu_custom_call.1} parent=11 // pred_check_branch
          %180 = sbr.rel (%p178) target = $region28
        $region27: #{tpu_custom_call.1} parent=11 // pred_region
          _
        $region28: #{tpu_custom_call.1} parent=11 // pred_fallthru
          _
      $region12: #{tpu_custom_call.1} parent=5 // pred_fallthru
        _
      %p181 = scmp.lt.s32.totalorder %s18, 2
      // Predicated region
      $region29: #{tpu_custom_call.1} parent=5 // pred_check
        %p182 = pneg %p181
      $region30: #{tpu_custom_call.1} parent=5 // pred_check_branch
        %184 = sbr.rel (%p182) target = $region32
      $region31: #{tpu_custom_call.1} parent=5 // pred_region
        // Predicated region
        $region33: #{tpu_custom_call.1} parent=31 // pred_check
          %p185 = pneg %p38
        $region34: #{tpu_custom_call.1} parent=31 // pred_check_branch
          %187 = sbr.rel (%p185) target = $region36
        $region35: #{tpu_custom_call.1} parent=31 // pred_region
          %s188 = sand.u32 %s28, 1
          %s189 = scalar_lea.sflag [#allocation4], %s188
          %s190 = sand.u32 %s28, 1
          %s191 = smul.addr %s190, 64
          %s192 = scalar_lea.vmem [#allocation3], %s191
          %194 = vsyncadd %s189, 0
          %s195 = smul.addr %s18, 8
          %s196 = smul.addr %s195, 8
          %s197 = scalar_lea.hbm %s0, %s196
          %s198 = sshll.u32 %s197, 4
          %s199 = int_to_ptr.hbm [resolvable:$true] %s198
          %s200 = sshll.u32 %s192, 4
          %s201 = int_to_ptr.vmem [resolvable:$true] %s200
          %206 = dma.hbm_to_vmem [thread:$0]  %s199, 1024, %s201, %s189, 256, 256, 16
        $region36: #{tpu_custom_call.1} parent=31 // pred_fallthru
          _
      $region32: #{tpu_custom_call.1} parent=5 // pred_fallthru
        _
      %p207 = scmp.le.s32.totalorder 1, %s18
      %p208 = scmp.lt.s32.totalorder %s18, 3
      %p209 = pnand %p207, %p208
      %p210 = pneg %p209
      // Predicated region
      $region37: #{tpu_custom_call.1} parent=5 // pred_check
        _
      $region38: #{tpu_custom_call.1} parent=5 // pred_check_branch
        %212 = sbr.rel (%p209) target = $region40
      $region39: #{tpu_custom_call.1} parent=5 // pred_region
        %s213 = ssub.s32 %s18, 1
        %s214 = sand.u32 %s31, 1
        %s215 = scalar_lea.sflag [#allocation4], %s214
        %s216 = sand.u32 %s31, 1
        %s217 = smul.addr %s216, 64
        %s218 = scalar_lea.vmem [#allocation3], %s217
        // Predicated region
        $region41: #{tpu_custom_call.1} parent=39 // pred_check
          %p219 = pneg %p44
        $region42: #{tpu_custom_call.1} parent=39 // pred_check_branch
          %221 = sbr.rel (%p219) target = $region44
        $region43: #{tpu_custom_call.1} parent=39 // pred_region
          %223 = dma.done %s215, 1024
        $region44: #{tpu_custom_call.1} parent=39 // pred_fallthru
          _
        %s224 = sand.u32 %s31, 1
        %s225 = scalar_lea.sflag [#allocation4], %s224
        %s226 = sand.u32 %s31, 1
        %s227 = smul.addr %s226, 64
        %s228 = scalar_lea.vmem [#allocation3], %s227
        %p229 = pneg %p44
        %p230 = pneg %p41
        %p231 = pneg %p65
        %p232 = pneg %p62
        %p233 = pneg %p86
        %p234 = pneg %p83
        %p235 = pneg %p107
        %p236 = pneg %p104
        %p237 = pneg %p128
        %p238 = pneg %p125
        %p239 = pneg %p154
        %p240 = pneg %p151
        %s241 = sand.u32 %s141, 1
        %s242 = scalar_lea.sflag [#allocation5], %s241
        %s243 = sand.u32 %s141, 1
        %s244 = smul.addr %s243, 64
        %s245 = scalar_lea.vmem [#allocation6], %s244
        %v246 = vld [vmem:[%s218] sm:$0xff]
        %v247 = vld [vmem:[%s218 + $0x8] sm:$0xff]
        %v248 = vld [vmem:[%s218 + $0x10] sm:$0xff]
        %v249 = vld [vmem:[%s218 + $0x18] sm:$0xff]
        %v250 = vld [vmem:[%s218 + $0x20] sm:$0xff]
        %v251 = vld [vmem:[%s218 + $0x28] sm:$0xff]
        %v252 = vld [vmem:[%s218 + $0x30] sm:$0xff]
        %v253 = vld [vmem:[%s218 + $0x38] sm:$0xff]
        %v254 = vadd.f32 %v246, %v247
        %255 = vadd.xlane.f32.xlu0 %v254
        %v256 = vpop.xlane.xlu0 %255
        %v257 = vadd.f32 %v248, %v249
        %258 = vadd.xlane.f32.xlu0 %v257
        %v259 = vpop.xlane.xlu0 %258
        %v260 = vadd.f32 %v250, %v251
        %261 = vadd.xlane.f32.xlu0 %v260
        %v262 = vpop.xlane.xlu0 %261
        %v263 = vadd.f32 %v252, %v253
        %264 = vadd.xlane.f32.xlu0 %v263
        %v265 = vpop.xlane.xlu0 %264
        %v266 = vmul.f32 %v256, 0.00390625
        %v267 = vmul.f32 %v259, 0.00390625
        %v268 = vmul.f32 %v262, 0.00390625
        %v269 = vmul.f32 %v265, 0.00390625
        %v270 = vld [vmem:[%s1] sm:$0x3]
        %vm271 = vcmask 261120
        %v273 = vsel %vm271, %v270, 0
        %275 = vmatpush.msra.mxu0 0.0
        %276 = vmatpush.msra.mxu0 0.0
        %277 = vmatpush.msra.mxu0 0.0
        %278 = vmatpush.msra.mxu0 0.0
        %279 = vmatpush.msra.mxu0 0.0
        %280 = vmatpush.msra.mxu0 0.0
        %281 = vmatpush.msra.mxu0 0.0
        %282 = vmatpush.msra.mxu0 0.0
        %283 = vmatpush.msra.mxu0 0.0
        %284 = vmatpush.msra.mxu0 0.0
        %285 = vmatpush.msra.mxu0 0.0
        %286 = vmatpush.msra.mxu0 0.0
        %287 = vmatpush.msra.mxu0 %v269
        %288 = vmatpush.msra.mxu0 %v268
        %289 = vmatpush.msra.mxu0 %v267
        %290 = vmatpush.msra.mxu0 %v266
        %291 = vmatmul.f32.gmra.mxu0 %v273
        %v292 = vpop.f32.mrf.mxu0
        %v293 = vadd.f32 0.0, %v292
        %294 = vdwg.mxu0
        %v295 = vmax.f32 %v293, 0.0
        %v296 = vld [vmem:[%s2] sm:$0xff]
        %v297 = vld [vmem:[%s2 + $0x8] sm:$0xff]
        %v298 = vld [vmem:[%s2 + $0x10] sm:$0xff]
        %v299 = vld [vmem:[%s2 + $0x18] sm:$0xff]
        %vm300 = vcmask 15360
        %v302 = vsel %vm300, %v296, 0
        %v305 = vsel %vm300, %v297, 0
        %v308 = vsel %vm300, %v298, 0
        %v311 = vsel %vm300, %v299, 0
        %vm313 = vcmask 1041408
        %v315 = vsel %vm313, %v295, 0
        %317 = vmatpush.msra.mxu0 0.0
        %318 = vmatpush.msra.mxu0 0.0
        %319 = vmatpush.msra.mxu0 0.0
        %320 = vmatpush.msra.mxu0 0.0
        %321 = vmatpush.msra.mxu0 0.0
        %322 = vmatpush.msra.mxu0 0.0
        %323 = vmatpush.msra.mxu0 0.0
        %324 = vmatpush.msra.mxu0 0.0
        %325 = vmatpush.msra.mxu0 0.0
        %326 = vmatpush.msra.mxu0 0.0
        %327 = vmatpush.msra.mxu0 0.0
        %328 = vmatpush.msra.mxu0 0.0
        %329 = vmatpush.msra.mxu0 0.0
        %330 = vmatpush.msra.mxu0 0.0
        %331 = vmatpush.msra.mxu0 0.0
        %332 = vmatpush.msra.mxu0 %v315
        %333 = vmatmul.f32.gmra.mxu0 %v302
        %v334 = vpop.f32.mrf.mxu0
        %v335 = vadd.f32 0.0, %v334
        %336 = vmatmul.f32.gmra.mxu0 %v305
        %v337 = vpop.f32.mrf.mxu0
        %v338 = vadd.f32 0.0, %v337
        %339 = vmatmul.f32.gmra.mxu0 %v308
        %v340 = vpop.f32.mrf.mxu0
        %v341 = vadd.f32 0.0, %v340
        %342 = vmatmul.f32.gmra.mxu0 %v311
        %v343 = vpop.f32.mrf.mxu0
        %v344 = vadd.f32 0.0, %v343
        %345 = vdwg.mxu0
        %v346 = vxor.u32 %v335, 2147483648
        %v347 = vxor.u32 %v338, 2147483648
        %v348 = vxor.u32 %v341, 2147483648
        %v349 = vxor.u32 %v344, 2147483648
        %v350 = vmul.f32 %v346, 1.442695
        %v351 = vpow.pop %v350
        %v352 = vmul.f32 %v347, 1.442695
        %v353 = vpow.pop %v352
        %v354 = vmul.f32 %v348, 1.442695
        %v355 = vpow.pop %v354
        %v356 = vmul.f32 %v349, 1.442695
        %v357 = vpow.pop %v356
        %v358 = vadd.f32 %v351, 1.0
        %v359 = vadd.f32 %v353, 1.0
        %v360 = vadd.f32 %v355, 1.0
        %v361 = vadd.f32 %v357, 1.0
        %v362 = vrcp.pop %v358
        %v363 = vmul.f32 %v358, %v362
        %v364 = vsub.f32 1.0, %v363
        %v365 = vmul.f32 %v362, %v364
        %v366 = vadd.f32 %v362, %v365
        %vm367 = vweird.f32 %v358
        %vm368 = vweird.f32 %v362
        %vm369 = vmor %vm367, %vm368
        %v370 = vsel %vm369, %v362, %v366
        %v371 = vand.u32 2147483647, %v358
        %vm372 = vcmp.eq.f32.partialorder %v371, 8.507059e+37
        %v373 = vand.u32 %v358, 2147483648
        %v374 = vor.u32 1.1754944e-38, %v373
        %v375 = vsel %vm372, %v374, %v370
        %v376 = vmul.f32 1.0, %v375
        %v377 = vrcp.pop %v359
        %v378 = vmul.f32 %v359, %v377
        %v379 = vsub.f32 1.0, %v378
        %v380 = vmul.f32 %v377, %v379
        %v381 = vadd.f32 %v377, %v380
        %vm382 = vweird.f32 %v359
        %vm383 = vweird.f32 %v377
        %vm384 = vmor %vm382, %vm383
        %v385 = vsel %vm384, %v377, %v381
        %v386 = vand.u32 2147483647, %v359
        %vm387 = vcmp.eq.f32.partialorder %v386, 8.507059e+37
        %v388 = vand.u32 %v359, 2147483648
        %v389 = vor.u32 1.1754944e-38, %v388
        %v390 = vsel %vm387, %v389, %v385
        %v391 = vmul.f32 1.0, %v390
        %v392 = vrcp.pop %v360
        %v393 = vmul.f32 %v360, %v392
        %v394 = vsub.f32 1.0, %v393
        %v395 = vmul.f32 %v392, %v394
        %v396 = vadd.f32 %v392, %v395
        %vm397 = vweird.f32 %v360
        %vm398 = vweird.f32 %v392
        %vm399 = vmor %vm397, %vm398
        %v400 = vsel %vm399, %v392, %v396
        %v401 = vand.u32 2147483647, %v360
        %vm402 = vcmp.eq.f32.partialorder %v401, 8.507059e+37
        %v403 = vand.u32 %v360, 2147483648
        %v404 = vor.u32 1.1754944e-38, %v403
        %v405 = vsel %vm402, %v404, %v400
        %v406 = vmul.f32 1.0, %v405
        %v407 = vrcp.pop %v361
        %v408 = vmul.f32 %v361, %v407
        %v409 = vsub.f32 1.0, %v408
        %v410 = vmul.f32 %v407, %v409
        %v411 = vadd.f32 %v407, %v410
        %vm412 = vweird.f32 %v361
        %vm413 = vweird.f32 %v407
        %vm414 = vmor %vm412, %vm413
        %v415 = vsel %vm414, %v407, %v411
        %v416 = vand.u32 2147483647, %v361
        %vm417 = vcmp.eq.f32.partialorder %v416, 8.507059e+37
        %v418 = vand.u32 %v361, 2147483648
        %v419 = vor.u32 1.1754944e-38, %v418
        %v420 = vsel %vm417, %v419, %v415
        %v421 = vmul.f32 1.0, %v420
        %v422 = vld [vmem:[%s3] sm:$0x1]
        %s423 = sld [smem:[#allocation2]]
        %v424 = vstv %s423
        %v426 = vsel %vm271, %v422, 0
        %428 = vmatpush.msra.mxu0 0.0
        %429 = vmatpush.msra.mxu0 0.0
        %430 = vmatpush.msra.mxu0 0.0
        %431 = vmatpush.msra.mxu0 0.0
        %432 = vmatpush.msra.mxu0 0.0
        %433 = vmatpush.msra.mxu0 0.0
        %434 = vmatpush.msra.mxu0 0.0
        %435 = vmatpush.msra.mxu0 0.0
        %436 = vmatpush.msra.mxu0 0.0
        %437 = vmatpush.msra.mxu0 0.0
        %438 = vmatpush.msra.mxu0 0.0
        %439 = vmatpush.msra.mxu0 0.0
        %440 = vmatpush.msra.mxu0 %v252
        %441 = vmatpush.msra.mxu0 %v250
        %442 = vmatpush.msra.mxu0 %v248
        %443 = vmatpush.msra.mxu0 %v246
        %444 = vmatmul.f32.gmra.mxu0 %v426
        %v445 = vpop.f32.mrf.mxu0
        %v446 = vadd.f32 %v424, %v445
        %447 = vdwg.mxu0
        %448 = vmatpush.msra.mxu0 0.0
        %449 = vmatpush.msra.mxu0 0.0
        %450 = vmatpush.msra.mxu0 0.0
        %451 = vmatpush.msra.mxu0 0.0
        %452 = vmatpush.msra.mxu0 0.0
        %453 = vmatpush.msra.mxu0 0.0
        %454 = vmatpush.msra.mxu0 0.0
        %455 = vmatpush.msra.mxu0 0.0
        %456 = vmatpush.msra.mxu0 0.0
        %457 = vmatpush.msra.mxu0 0.0
        %458 = vmatpush.msra.mxu0 0.0
        %459 = vmatpush.msra.mxu0 0.0
        %460 = vmatpush.msra.mxu0 %v253
        %461 = vmatpush.msra.mxu0 %v251
        %462 = vmatpush.msra.mxu0 %v249
        %463 = vmatpush.msra.mxu0 %v247
        %464 = vmatmul.f32.gmra.mxu0 %v426
        %v465 = vpop.f32.mrf.mxu0
        %v466 = vadd.f32 %v424, %v465
        %467 = vdwg.mxu0
        %v468 = vxor.u32 %v446, 2147483648
        %v469 = vxor.u32 %v466, 2147483648
        %v470 = vmul.f32 %v468, 1.442695
        %v471 = vpow.pop %v470
        %v472 = vmul.f32 %v469, 1.442695
        %v473 = vpow.pop %v472
        %v474 = vadd.f32 %v471, 1.0
        %v475 = vadd.f32 %v473, 1.0
        %v476 = vrcp.pop %v474
        %v477 = vmul.f32 %v474, %v476
        %v478 = vsub.f32 1.0, %v477
        %v479 = vmul.f32 %v476, %v478
        %v480 = vadd.f32 %v476, %v479
        %vm481 = vweird.f32 %v474
        %vm482 = vweird.f32 %v476
        %vm483 = vmor %vm481, %vm482
        %v484 = vsel %vm483, %v476, %v480
        %v485 = vand.u32 2147483647, %v474
        %vm486 = vcmp.eq.f32.partialorder %v485, 8.507059e+37
        %v487 = vand.u32 %v474, 2147483648
        %v488 = vor.u32 1.1754944e-38, %v487
        %v489 = vsel %vm486, %v488, %v484
        %v490 = vmul.f32 1.0, %v489
        %v491 = vrcp.pop %v475
        %v492 = vmul.f32 %v475, %v491
        %v493 = vsub.f32 1.0, %v492
        %v494 = vmul.f32 %v491, %v493
        %v495 = vadd.f32 %v491, %v494
        %vm496 = vweird.f32 %v475
        %vm497 = vweird.f32 %v491
        %vm498 = vmor %vm496, %vm497
        %v499 = vsel %vm498, %v491, %v495
        %v500 = vand.u32 2147483647, %v475
        %vm501 = vcmp.eq.f32.partialorder %v500, 8.507059e+37
        %v502 = vand.u32 %v475, 2147483648
        %v503 = vor.u32 1.1754944e-38, %v502
        %v504 = vsel %vm501, %v503, %v499
        %v505 = vmul.f32 1.0, %v504
        %507 = vset.pattern.permute.xlu0 0
        %508 = vperm.xlu0 %507, %v376
        %v509 = vpop.permute.xlu0 %508
        %512 = vset.pattern.permute.xlu0 0
        %513 = vperm.xlu0 %512, %v391
        %v514 = vpop.permute.xlu0 %513
        %517 = vset.pattern.permute.xlu0 0
        %518 = vperm.xlu0 %517, %v406
        %v519 = vpop.permute.xlu0 %518
        %522 = vset.pattern.permute.xlu0 0
        %523 = vperm.xlu0 %522, %v421
        %v524 = vpop.permute.xlu0 %523
        %v526 = vperm.slane %v490, 0
        %v527 = vperm.slane %v505, 0
        %v528 = vadd.f32 %v509, %v526
        %v529 = vadd.f32 %v509, %v527
        %v530 = vadd.f32 %v514, %v526
        %v531 = vadd.f32 %v514, %v527
        %v532 = vadd.f32 %v519, %v526
        %v533 = vadd.f32 %v519, %v527
        %v534 = vadd.f32 %v524, %v526
        %v535 = vadd.f32 %v524, %v527
        %v536 = vmul.f32 %v246, %v528
        %v537 = vmul.f32 %v247, %v529
        %v538 = vmul.f32 %v248, %v530
        %v539 = vmul.f32 %v249, %v531
        %v540 = vmul.f32 %v250, %v532
        %v541 = vmul.f32 %v251, %v533
        %v542 = vmul.f32 %v252, %v534
        %v543 = vmul.f32 %v253, %v535
        %544 = vst [vmem:[%s245] sm:$0xff] %v536
        %545 = vst [vmem:[%s245 + $0x8] sm:$0xff] %v537
        %546 = vst [vmem:[%s245 + $0x10] sm:$0xff] %v538
        %547 = vst [vmem:[%s245 + $0x18] sm:$0xff] %v539
        %548 = vst [vmem:[%s245 + $0x20] sm:$0xff] %v540
        %549 = vst [vmem:[%s245 + $0x28] sm:$0xff] %v541
        %550 = vst [vmem:[%s245 + $0x30] sm:$0xff] %v542
        %551 = vst [vmem:[%s245 + $0x38] sm:$0xff] %v543
        %s552 = sand.u32 %s141, 1
        %s553 = scalar_lea.sflag [#allocation5], %s552
        %s554 = sand.u32 %s141, 1
        %s555 = smul.addr %s554, 64
        %s556 = scalar_lea.vmem [#allocation6], %s555
        // Predicated region
        $region45: #{tpu_custom_call.1} parent=39 // pred_check
          %p557 = pneg %p151
        $region46: #{tpu_custom_call.1} parent=39 // pred_check_branch
          %559 = sbr.rel (%p557) target = $region48
        $region47: #{tpu_custom_call.1} parent=39 // pred_region
          %561 = vsyncadd %s553, 0
          %s562 = smul.addr %s23, 8
          %s563 = smul.addr %s562, 8
          %s564 = scalar_lea.hbm %s5, %s563
          %s565 = sshll.u32 %s556, 4
          %s566 = int_to_ptr.vmem [resolvable:$true] %s565
          %s567 = sshll.u32 %s564, 4
          %s568 = int_to_ptr.hbm [resolvable:$true] %s567
          %573 = dma.vmem_to_hbm [thread:$0]  %s566, 1024, %s568, %s553, 256, 256, 16
        $region48: #{tpu_custom_call.1} parent=39 // pred_fallthru
          _
      $region40: #{tpu_custom_call.1} parent=5 // pred_fallthru
        _
      %p574 = scmp.le.s32.totalorder 2, %s18
      // Predicated region
      $region49: #{tpu_custom_call.1} parent=5 // pred_check
        %p575 = pneg %p574
      $region50: #{tpu_custom_call.1} parent=5 // pred_check_branch
        %577 = sbr.rel (%p575) target = $region52
      $region51: #{tpu_custom_call.1} parent=5 // pred_region
        %s578 = ssub.s32 %s18, 2
        // Predicated region
        $region53: #{tpu_custom_call.1} parent=51 // pred_check
          %p579 = pneg %p157
        $region54: #{tpu_custom_call.1} parent=51 // pred_check_branch
          %581 = sbr.rel (%p579) target = $region56
        $region55: #{tpu_custom_call.1} parent=51 // pred_region
          %s582 = sand.u32 %s142, 1
          %s583 = scalar_lea.sflag [#allocation5], %s582
          %s584 = sand.u32 %s142, 1
          %s585 = smul.addr %s584, 64
          %s586 = scalar_lea.vmem [#allocation6], %s585
          %588 = dma.done %s583, 1024
        $region56: #{tpu_custom_call.1} parent=51 // pred_fallthru
          _
      $region52: #{tpu_custom_call.1} parent=5 // pred_fallthru
        _
    $region6: #{tpu_custom_call.1} parent=1 // loop_footer
      %s22 = sadd.s32 1, %s18
    $region7: #{tpu_custom_call.1} parent=1 // loop_footer_branch
      %17 = sbr.rel target = $region3
    $region8: #{tpu_custom_call.1} parent=1 // loop_exit
      _
    %589 = vsyncpa [#allocation4], 1
    %s590 = scalar_lea.sflag [#allocation4], 1
    %591 = vsyncpa %s590, 1
    %592 = vsyncpa [#allocation5], 1
    %s593 = scalar_lea.sflag [#allocation5], 1
    %594 = vsyncpa %s593, 1

</llo_original>
